<compile_context>
chip_gen: v5e
topology: v5e:2x2
jax: 0.10.0
libtpu: 0.0.40
codegen_flags: <defaults>
</compile_context>

<pallas_src>
import math

import jax
import jax.numpy as jnp
from jax.experimental import pallas as pl
from jax.experimental.pallas import tpu as pltpu


def _round_up(x, m):
    return ((x + m - 1) // m) * m


def _kernel_f32_out(x_ref, wt_ref, b_ref, xa_ref, bc_ref, o_ref):
    """f32-output variant: accumulate directly into o_ref (no acc scratch).

    x_ref  : (tm, tk)      activation tile (compute dtype)
    wt_ref : (tk, tn)      pre-transposed frozen weight tile (K, N layout)
    b_ref  : (1, tn)       bias tile (f32)
    xa_ref : (tm, r_pad)   hoisted LoRA down-projection tile (compute dtype)
    bc_ref : (r_pad, tn)   r-concatenated, scale-folded LoRA B tile
    o_ref  : (tm, tn) f32  output tile (resident across K)
    """
    k = pl.program_id(2)
    nk = pl.num_programs(2)

    @pl.when(k == 0)
    def _init():
        # Fold the bias into the accumulator init (added exactly once).
        o_ref[...] = jnp.broadcast_to(b_ref[...].astype(jnp.float32),
                                      o_ref.shape)

    o_ref[...] += jnp.dot(x_ref[...], wt_ref[...],
                          preferred_element_type=jnp.float32)

    @pl.when(k == nk - 1)
    def _finalize():
        # Single fused LoRA up-projection (scales already folded into bc).
        o_ref[...] += jnp.dot(xa_ref[...], bc_ref[...],
                              preferred_element_type=jnp.float32)


def _kernel_acc_out(x_ref, wt_ref, b_ref, xa_ref, bc_ref, o_ref, acc_ref):
    """Narrow-output variant: f32 VMEM accumulator, cast on the last K step."""
    k = pl.program_id(2)
    nk = pl.num_programs(2)

    @pl.when(k == 0)
    def _init():
        acc_ref[...] = jnp.broadcast_to(b_ref[...].astype(jnp.float32),
                                        acc_ref.shape)

    acc_ref[...] += jnp.dot(x_ref[...], wt_ref[...],
                            preferred_element_type=jnp.float32)

    @pl.when(k == nk - 1)
    def _finalize():
        lora = jnp.dot(xa_ref[...], bc_ref[...],
                       preferred_element_type=jnp.float32)
        o_ref[...] = (acc_ref[...] + lora).astype(o_ref.dtype)


def prepare_multi_lora_params(weight, bias, lora_A_list, lora_B_list,
                              lora_alpha, *, tn=1024, tk=512,
                              compute_dtype=jnp.bfloat16):
    """One-time parameter preprocessing (do this at weight-load time).

    Produces pre-transposed, pre-padded, pre-cast slabs so the per-call path
    never touches the frozen weight again outside the kernel's own DMA.
    """
    out_features, in_features = weight.shape

    tn = min(tn, _round_up(out_features, 128))
    tk = min(tk, _round_up(in_features, 128))
    n_pad = _round_up(out_features, tn)
    k_pad = _round_up(in_features, tk)

    if lora_A_list:
        scales = [float(lora_alpha) / a.shape[0] for a in lora_A_list]
        a_cat = jnp.concatenate(
            [a.astype(jnp.float32) for a in lora_A_list], axis=0)      # (R, K)
        # Fold the per-adapter scale into B (in f32) before casting.
        b_cat = jnp.concatenate(
            [lora_B_list[th].astype(jnp.float32).T * scales[th]
             for th in range(len(lora_A_list))], axis=0)               # (R, N)
        r_sum = a_cat.shape[0]
    else:
        r_sum = 0
        a_cat = jnp.zeros((0, in_features), jnp.float32)
        b_cat = jnp.zeros((0, out_features), jnp.float32)
    r_pad = max(128, _round_up(max(r_sum, 1), 128))                    # lane-dense

    # Lane-dense (K, N) RHS layout: no in-kernel XLU transpose.
    wt = jnp.pad(weight.T.astype(compute_dtype),
                 ((0, k_pad - in_features), (0, n_pad - out_features)))
    at = a_cat.T.astype(compute_dtype)                                 # (K, R)
    bc = jnp.pad(b_cat, ((0, r_pad - r_sum),
                         (0, n_pad - out_features))).astype(compute_dtype)
    bias2d = jnp.pad(bias.astype(jnp.float32).reshape(1, out_features),
                     ((0, 0), (0, n_pad - out_features)))

    return dict(wt=wt, at=at, bc=bc, bias=bias2d,
                in_features=in_features, out_features=out_features,
                tn=tn, tk=tk, n_pad=n_pad, k_pad=k_pad,
                r_pad=r_pad, r_sum=r_sum, compute_dtype=compute_dtype)


def multi_lora_linear_apply(x, params, *, tm=512):
    """x: (..., in_features) -> (..., out_features), using prepared params."""
    orig_dtype = x.dtype
    *lead, in_features = x.shape
    assert in_features == params["in_features"]

    cd = params["compute_dtype"]
    out_features = params["out_features"]
    tn, tk = params["tn"], params["tk"]
    n_pad, k_pad, r_pad = params["n_pad"], params["k_pad"], params["r_pad"]

    m = 1
    for d in lead:
        m *= d
    x2d = x.reshape(m, in_features)

    # Hoisted LoRA down-projection: one tiny (m, K) @ (K, R) matmul per call,
    # f32 accumulation, instead of a per-(i,j,k) in-kernel matmul + DMA.
    if params["r_sum"] > 0:
        xa = jnp.dot(x2d.astype(cd), params["at"],
                     preferred_element_type=jnp.float32)               # (m, R)
    else:
        xa = jnp.zeros((m, 0), jnp.float32)

    tm = min(tm, _round_up(m, 8))
    m_pad = _round_up(m, tm)

    # Zero padding: K-padding contributes 0 to the dots; M padding sliced off.
    x_p = jnp.pad(x2d.astype(cd),
                  ((0, m_pad - m), (0, k_pad - in_features)))
    xa_p = jnp.pad(xa.astype(cd),
                   ((0, m_pad - m), (0, r_pad - xa.shape[1])))

    grid = (m_pad // tm, n_pad // tn, k_pad // tk)

    out_is_f32 = (orig_dtype == jnp.float32)
    kernel = _kernel_f32_out if out_is_f32 else _kernel_acc_out
    scratch = [] if out_is_f32 else [pltpu.VMEM((tm, tn), jnp.float32)]

    itemsize = jnp.dtype(cd).itemsize
    flops = 2 * m_pad * k_pad * n_pad + 2 * m_pad * r_pad * n_pad
    bytes_accessed = (x_p.size * itemsize
                      + params["wt"].size * itemsize
                      + xa_p.size * itemsize
                      + params["bc"].size * itemsize
                      + params["bias"].size * 4
                      + m_pad * n_pad * jnp.dtype(orig_dtype).itemsize)
    cost = pl.CostEstimate(flops=int(flops), transcendentals=0,
                           bytes_accessed=int(bytes_accessed))

    out = pl.pallas_call(
        kernel,
        out_shape=jax.ShapeDtypeStruct((m_pad, n_pad), orig_dtype),
        grid_spec=pltpu.PrefetchScalarGridSpec(
            num_scalar_prefetch=0,
            grid=grid,
            in_specs=[
                pl.BlockSpec((tm, tk), lambda i, j, k: (i, k)),      # x
                pl.BlockSpec((tk, tn), lambda i, j, k: (k, j)),      # W.T
                pl.BlockSpec((1, tn), lambda i, j, k: (0, j)),       # bias
                pl.BlockSpec((tm, r_pad), lambda i, j, k: (i, 0)),   # xa (hoisted)
                pl.BlockSpec((r_pad, tn), lambda i, j, k: (0, j)),   # B_cat (scaled)
            ],
            out_specs=pl.BlockSpec((tm, tn), lambda i, j, k: (i, j)),
            scratch_shapes=scratch,
        ),
        compiler_params=pltpu.CompilerParams(
            dimension_semantics=("parallel", "parallel", "arbitrary"),
            vmem_limit_bytes=48 * 1024 * 1024),
        cost_estimate=cost,
    )(x_p, params["wt"], params["bias"], xa_p, params["bc"])

    out = out[:m, :out_features]
    return out.reshape(*lead, out_features)


def multi_lora_linear(x, weight, bias, lora_A_list, lora_B_list, lora_alpha,
                      *, tm=512, tn=1024, tk=512,
                      compute_dtype=jnp.bfloat16):
    """Convenience one-shot wrapper (prepare + apply). For repeated forward
    calls, call prepare_multi_lora_params() once and reuse the result."""
    params = prepare_multi_lora_params(
        weight, bias, lora_A_list, lora_B_list, lora_alpha,
        tn=tn, tk=tk, compute_dtype=compute_dtype)
    return multi_lora_linear_apply(x, params, tm=tm)


if __name__ == "__main__":
    # Small, deterministic synthetic configuration (128-aligned, still tiny).
    batch, seq = 2, 64
    in_features, out_features = 256, 256
    r_list = [4, 8]
    lora_num = len(r_list)
    lora_alpha = 16.0

    key = jax.random.PRNGKey(0)
    k_x, k_w, k_b, *k_lora = jax.random.split(key, 4 + 2 * lora_num)

    x = jax.random.normal(k_x, (batch, seq, in_features), dtype=jnp.float32)
    weight = jax.random.normal(
        k_w, (out_features, in_features), dtype=jnp.float32) * 0.1
    bias = jax.random.normal(k_b, (out_features,), dtype=jnp.float32) * 0.1

    # Deterministic LoRA params.  (PyTorch init zeros B -> zero LoRA output;
    # nonzero values here so the LoRA path is actually exercised.)
    lora_A_list = []
    lora_B_list = []
    for th in range(lora_num):
        bound = 1.0 / math.sqrt(in_features)  # kaiming_uniform(a=sqrt(5)) bound
        a = jax.random.uniform(
            k_lora[2 * th], (r_list[th], in_features),
            minval=-bound, maxval=bound, dtype=jnp.float32)
        b = jax.random.normal(
            k_lora[2 * th + 1], (out_features, r_list[th]),
            dtype=jnp.float32) * 0.05
        lora_A_list.append(a)
        lora_B_list.append(b)

    # Pure-JAX f32 reference (matches the PyTorch module forward).
    ref = x @ weight.T + bias
    for th in range(lora_num):
        ref = ref + (x @ lora_A_list[th].T @ lora_B_list[th].T) * (
            lora_alpha / r_list[th])

    # 1) Exact-math path (compute_dtype=f32, direct-accumulate kernel).
    params_f32 = prepare_multi_lora_params(
        weight, bias, lora_A_list, lora_B_list, lora_alpha,
        compute_dtype=jnp.float32)
    y_f32 = jax.block_until_ready(multi_lora_linear_apply(x, params_f32))
    assert y_f32.shape == (batch, seq, out_features)
    assert jnp.allclose(y_f32, ref, atol=1e-3, rtol=1e-3), (
        float(jnp.max(jnp.abs(y_f32 - ref))))

    # 2) Default performance path (bf16 MXU operands, f32 accumulation).
    params_bf16 = prepare_multi_lora_params(
        weight, bias, lora_A_list, lora_B_list, lora_alpha,
        compute_dtype=jnp.bfloat16)
    y_bf16 = jax.block_until_ready(multi_lora_linear_apply(x, params_bf16))
    assert jnp.allclose(y_bf16, ref, atol=7.5e-2, rtol=2e-2), (
        float(jnp.max(jnp.abs(y_bf16 - ref))))

    # 3) Narrow-output path (bf16 activations -> acc-scratch kernel variant).
    y_narrow = jax.block_until_ready(
        multi_lora_linear_apply(x.astype(jnp.bfloat16), params_bf16))
    assert y_narrow.dtype == jnp.bfloat16
    assert jnp.allclose(y_narrow.astype(jnp.float32), ref,
                        atol=1.5e-1, rtol=5e-2), (
        float(jnp.max(jnp.abs(y_narrow.astype(jnp.float32) - ref))))

    print("KERNEL_OK")
</pallas_src>

<mosaic_0001>
module attributes {stable_mosaic.version = 11 : i64} {
  func.func @_kernel_f32_out(%arg0: i32, %arg1: i32, %arg2: i32, %arg3: memref<128x256xf32, #tpu.memory_space<vmem>>, %arg4: memref<256x256xf32, #tpu.memory_space<vmem>>, %arg5: memref<1x256xf32, #tpu.memory_space<vmem>>, %arg6: memref<128x128xf32, #tpu.memory_space<vmem>>, %arg7: memref<128x256xf32, #tpu.memory_space<vmem>>, %arg8: memref<128x256xf32, #tpu.memory_space<vmem>>) attributes {dimension_semantics = [#tpu.dimension_semantics<parallel>, #tpu.dimension_semantics<parallel>, #tpu.dimension_semantics<arbitrary>], iteration_bounds = array<i64: 1, 1, 1>, scalar_prefetch = 0 : i64, scratch_operands = 0 : i64, tpu.core_type = #tpu.core_type<tc>, window_params = [{transform_indices = @transform_0, window_bounds = array<i64: 128, 256>}, {transform_indices = @transform_1, window_bounds = array<i64: 256, 256>}, {transform_indices = @transform_2, window_bounds = array<i64: 1, 256>}, {transform_indices = @transform_3, window_bounds = array<i64: 128, 128>}, {transform_indices = @transform_4, window_bounds = array<i64: 128, 256>}, {transform_indices = @transform_5, window_bounds = array<i64: 128, 256>}]} {
    %c0_i32 = arith.constant 0 : i32
    %0 = arith.cmpi eq, %arg2, %c0_i32 : i32
    %1 = arith.extui %0 : i1 to i32
    %c0_i32_0 = arith.constant 0 : i32
    %2 = arith.cmpi ne, %1, %c0_i32_0 : i32
    scf.if %2 {
      %c0_10 = arith.constant 0 : index
      %c0_11 = arith.constant 0 : index
      %12 = vector.load %arg5[%c0_10, %c0_11] : memref<1x256xf32, #tpu.memory_space<vmem>>, vector<1x256xf32>
      %13 = vector.shape_cast %12 : vector<1x256xf32> to vector<1x256xf32>
      %14 = vector.broadcast %13 : vector<1x256xf32> to vector<128x256xf32>
      %c0_12 = arith.constant 0 : index
      %c0_13 = arith.constant 0 : index
      %15 = vector.load %arg8[%c0_12, %c0_13] : memref<128x256xf32, #tpu.memory_space<vmem>>, vector<128x256xf32>
      tpu.vector_store %arg8[%c0_12, %c0_13], %14 {strides = array<i32>} : memref<128x256xf32, #tpu.memory_space<vmem>>, vector<128x256xf32>,
    } else {
    }
    %c0 = arith.constant 0 : index
    %c0_1 = arith.constant 0 : index
    %3 = vector.load %arg8[%c0, %c0_1] : memref<128x256xf32, #tpu.memory_space<vmem>>, vector<128x256xf32>
    %c0_2 = arith.constant 0 : index
    %c0_3 = arith.constant 0 : index
    %4 = vector.load %arg3[%c0_2, %c0_3] : memref<128x256xf32, #tpu.memory_space<vmem>>, vector<128x256xf32>
    %c0_4 = arith.constant 0 : index
    %c0_5 = arith.constant 0 : index
    %5 = vector.load %arg4[%c0_4, %c0_5] : memref<256x256xf32, #tpu.memory_space<vmem>>, vector<256x256xf32>
    %cst = arith.constant dense<0.000000e+00> : vector<128x256xf32>
    %6 = tpu.matmul %4, %5, %cst {dimension_numbers = #tpu.dot_dimension_numbers<[1], [0], [0], [1], [0, 0, 1, 1], [], []>} : vector<128x256xf32>, vector<256x256xf32>, vector<128x256xf32> -> vector<128x256xf32>
    %7 = arith.addf %3, %6 : vector<128x256xf32>
    %c0_6 = arith.constant 0 : index
    %c0_7 = arith.constant 0 : index
    %8 = vector.load %arg8[%c0_6, %c0_7] : memref<128x256xf32, #tpu.memory_space<vmem>>, vector<128x256xf32>
    tpu.vector_store %arg8[%c0_6, %c0_7], %7 {strides = array<i32>} : memref<128x256xf32, #tpu.memory_space<vmem>>, vector<128x256xf32>,
    %c0_i32_8 = arith.constant 0 : i32
    %9 = arith.cmpi eq, %arg2, %c0_i32_8 : i32
    %10 = arith.extui %9 : i1 to i32
    %c0_i32_9 = arith.constant 0 : i32
    %11 = arith.cmpi ne, %10, %c0_i32_9 : i32
    scf.if %11 {
      %c0_10 = arith.constant 0 : index
      %c0_11 = arith.constant 0 : index
      %12 = vector.load %arg8[%c0_10, %c0_11] : memref<128x256xf32, #tpu.memory_space<vmem>>, vector<128x256xf32>
      %c0_12 = arith.constant 0 : index
      %c0_13 = arith.constant 0 : index
      %13 = vector.load %arg6[%c0_12, %c0_13] : memref<128x128xf32, #tpu.memory_space<vmem>>, vector<128x128xf32>
      %c0_14 = arith.constant 0 : index
      %c0_15 = arith.constant 0 : index
      %14 = vector.load %arg7[%c0_14, %c0_15] : memref<128x256xf32, #tpu.memory_space<vmem>>, vector<128x256xf32>
      %cst_16 = arith.constant dense<0.000000e+00> : vector<128x256xf32>
      %15 = tpu.matmul %13, %14, %cst_16 {dimension_numbers = #tpu.dot_dimension_numbers<[1], [0], [0], [1], [0, 0, 1, 1], [], []>} : vector<128x128xf32>, vector<128x256xf32>, vector<128x256xf32> -> vector<128x256xf32>
      %16 = arith.addf %12, %15 : vector<128x256xf32>
      %c0_17 = arith.constant 0 : index
      %c0_18 = arith.constant 0 : index
      %17 = vector.load %arg8[%c0_17, %c0_18] : memref<128x256xf32, #tpu.memory_space<vmem>>, vector<128x256xf32>
      tpu.vector_store %arg8[%c0_17, %c0_18], %16 {strides = array<i32>} : memref<128x256xf32, #tpu.memory_space<vmem>>, vector<128x256xf32>,
    } else {
    }
    return
  }
  func.func @transform_0(%arg0: i32, %arg1: i32, %arg2: i32) -> (i32, i32) {
    %c0_i32 = arith.constant 0 : i32
    return %arg0, %arg2 : i32, i32
  }
  func.func @transform_1(%arg0: i32, %arg1: i32, %arg2: i32) -> (i32, i32) {
    %c0_i32 = arith.constant 0 : i32
    return %arg2, %arg1 : i32, i32
  }
  func.func @transform_2(%arg0: i32, %arg1: i32, %arg2: i32) -> (i32, i32) {
    %c0_i32 = arith.constant 0 : i32
    %c0_i32_0 = arith.constant 0 : i32
    return %c0_i32, %arg1 : i32, i32
  }
  func.func @transform_3(%arg0: i32, %arg1: i32, %arg2: i32) -> (i32, i32) {
    %c0_i32 = arith.constant 0 : i32
    %c0_i32_0 = arith.constant 0 : i32
    return %arg0, %c0_i32 : i32, i32
  }
  func.func @transform_4(%arg0: i32, %arg1: i32, %arg2: i32) -> (i32, i32) {
    %c0_i32 = arith.constant 0 : i32
    %c0_i32_0 = arith.constant 0 : i32
    return %c0_i32, %arg1 : i32, i32
  }
  func.func @transform_5(%arg0: i32, %arg1: i32, %arg2: i32) -> (i32, i32) {
    %c0_i32 = arith.constant 0 : i32
    return %arg0, %arg1 : i32, i32
  }
}

</mosaic_0001>

<llo_original>
// kernel: tpu_custom_call.1
$region0: #{tpu_custom_call.1}
  #allocation0 [shape = 'u32[]', space=smem, size = 0x4, offset = 0x4, fixed_abs, tag = 'smem constant byte address 0x4 - core index']
  #allocation1 [shape = 'u32[72,128]{1,0:T(1,128)}', space=vmem, size = 0x9000, scoped, tag = 'internal scratch']
  %s0 = inlined_call_operand.hbm [shape: f32[128,256], index: 0, kind: input, shape index: {}]
  %s1 = inlined_call_operand.hbm [shape: f32[256,256], index: 1, kind: input, shape index: {}]
  %s2 = inlined_call_operand.hbm [shape: f32[1,256], index: 2, kind: input, shape index: {}]
  %s3 = inlined_call_operand.hbm [shape: f32[128,128], index: 3, kind: input, shape index: {}]
  %s4 = inlined_call_operand.hbm [shape: f32[128,256], index: 4, kind: input, shape index: {}]
  %s5 = inlined_call_operand.hbm [shape: f32[128,256], index: 5, kind: output, shape index: {}]
  %s6 = sld [smem:[#allocation0]]
  $region58: #{tpu_custom_call.1} parent=0
    _
  %s8 = ssub.s32 1, %s6
  %s9 = scalar_select 0, %s8, %s6
  $region1: #{tpu_custom_call.1} parent=0
    #allocation2 [shape = 'u8[131072]{0}', space=vmem, size = 0x20000, scoped, tag = 'input window, operand 0, single buffered']
    #allocation3 [shape = 's32[1]{0}', space=sflag, size = 0x4, scoped, tag = 'scoped memory for tpu_custom_call.1']
    #allocation4 [shape = 's32[1]{0}', space=sflag, size = 0x4, scoped, tag = 'scoped memory for tpu_custom_call.1']
    #allocation5 [shape = 'u8[262144]{0}', space=vmem, size = 0x40000, scoped, tag = 'input window, operand 1, single buffered']
    #allocation6 [shape = 's32[1]{0}', space=sflag, size = 0x4, scoped, tag = 'scoped memory for tpu_custom_call.1']
    #allocation7 [shape = 'u8[1024]{0}', space=vmem, size = 0x400, scoped, tag = 'input window, operand 2, single buffered']
    #allocation8 [shape = 'u8[65536]{0}', space=vmem, size = 0x10000, scoped, tag = 'input window, operand 3, single buffered']
    #allocation9 [shape = 's32[1]{0}', space=sflag, size = 0x4, scoped, tag = 'scoped memory for tpu_custom_call.1']
    #allocation10 [shape = 'u8[131072]{0}', space=vmem, size = 0x20000, scoped, tag = 'input window, operand 4, single buffered']
    #allocation11 [shape = 'u8[131072]{0}', space=vmem, size = 0x20000, scoped, tag = 'output window, operand 0, single buffered']
    %10 = vsyncpa [#allocation3], 0
    %11 = vsyncpa [#allocation6], 0
    %12 = vsyncpa [#allocation9], 0
    %13 = vsyncpa [#allocation4], 0
    // Predicated region
    $region2: #{tpu_custom_call.1} parent=1 // pred_check
      _
    $region3: #{tpu_custom_call.1} parent=1 // pred_check_branch
      %15 = sbr.rel (0) target = $region5
    $region4: #{tpu_custom_call.1} parent=1 // pred_region
      %17 = vsyncadd [#allocation3], 0
      %s18 = sshll.u32 %s0, 4
      %s19 = int_to_ptr.hbm [resolvable:$true] %s18
      %s20 = sshll.u32 [#allocation2], 4
      %s21 = int_to_ptr.vmem [resolvable:$true] %s20
      %26 = dma.hbm_to_vmem [thread:$0]  %s19, 4096, %s21, [#allocation3], 256, 256, 16
    $region5: #{tpu_custom_call.1} parent=1 // pred_fallthru
      _
    // Predicated region
    $region6: #{tpu_custom_call.1} parent=1 // pred_check
      _
    $region7: #{tpu_custom_call.1} parent=1 // pred_check_branch
      %28 = sbr.rel (0) target = $region9
    $region8: #{tpu_custom_call.1} parent=1 // pred_region
      %30 = vsyncadd [#allocation6], 0
      %s31 = sshll.u32 %s1, 4
      %s32 = int_to_ptr.hbm [resolvable:$true] %s31
      %s33 = sshll.u32 [#allocation5], 4
      %s34 = int_to_ptr.vmem [resolvable:$true] %s33
      %39 = dma.hbm_to_vmem [thread:$0]  %s32, 8192, %s34, [#allocation6], 256, 256, 16
    $region9: #{tpu_custom_call.1} parent=1 // pred_fallthru
      _
    // Predicated region
    $region10: #{tpu_custom_call.1} parent=1 // pred_check
      _
    $region11: #{tpu_custom_call.1} parent=1 // pred_check_branch
      %41 = sbr.rel (0) target = $region13
    $region12: #{tpu_custom_call.1} parent=1 // pred_region
      %43 = vsyncadd [#allocation6], 0
      %s45 = sshll.u32 %s2, 4
      %s46 = int_to_ptr.hbm [resolvable:$true] %s45
      %s47 = sshll.u32 [#allocation7], 4
      %s48 = int_to_ptr.vmem [resolvable:$true] %s47
      %50 = dma.hbm_to_vmem [thread:$0]  %s46, 32, %s48, [#allocation6]
    $region13: #{tpu_custom_call.1} parent=1 // pred_fallthru
      _
    // Predicated region
    $region14: #{tpu_custom_call.1} parent=1 // pred_check
      _
    $region15: #{tpu_custom_call.1} parent=1 // pred_check_branch
      %52 = sbr.rel (0) target = $region17
    $region16: #{tpu_custom_call.1} parent=1 // pred_region
      %54 = vsyncadd [#allocation9], 0
      %s55 = sshll.u32 %s3, 4
      %s56 = int_to_ptr.hbm [resolvable:$true] %s55
      %s57 = sshll.u32 [#allocation8], 4
      %s58 = int_to_ptr.vmem [resolvable:$true] %s57
      %63 = dma.hbm_to_vmem [thread:$0]  %s56, 2048, %s58, [#allocation9], 128, 128, 8
    $region17: #{tpu_custom_call.1} parent=1 // pred_fallthru
      _
    // Predicated region
    $region18: #{tpu_custom_call.1} parent=1 // pred_check
      _
    $region19: #{tpu_custom_call.1} parent=1 // pred_check_branch
      %65 = sbr.rel (0) target = $region21
    $region20: #{tpu_custom_call.1} parent=1 // pred_region
      %67 = vsyncadd [#allocation9], 0
      %s68 = sshll.u32 %s4, 4
      %s69 = int_to_ptr.hbm [resolvable:$true] %s68
      %s70 = sshll.u32 [#allocation10], 4
      %s71 = int_to_ptr.vmem [resolvable:$true] %s70
      %76 = dma.hbm_to_vmem [thread:$0]  %s69, 4096, %s71, [#allocation9], 256, 256, 16
    $region21: #{tpu_custom_call.1} parent=1 // pred_fallthru
      _
    // Predicated region
    $region22: #{tpu_custom_call.1} parent=1 // pred_check
      _
    $region23: #{tpu_custom_call.1} parent=1 // pred_check_branch
      %78 = sbr.rel (0) target = $region25
    $region24: #{tpu_custom_call.1} parent=1 // pred_region
      %80 = dma.done [#allocation3], 4096
    $region25: #{tpu_custom_call.1} parent=1 // pred_fallthru
      _
    // Predicated region
    $region26: #{tpu_custom_call.1} parent=1 // pred_check
      _
    $region27: #{tpu_custom_call.1} parent=1 // pred_check_branch
      %82 = sbr.rel (0) target = $region29
    $region28: #{tpu_custom_call.1} parent=1 // pred_region
      %84 = dma.done [#allocation6], 8192
    $region29: #{tpu_custom_call.1} parent=1 // pred_fallthru
      _
    // Predicated region
    $region30: #{tpu_custom_call.1} parent=1 // pred_check
      _
    $region31: #{tpu_custom_call.1} parent=1 // pred_check_branch
      %86 = sbr.rel (0) target = $region33
    $region32: #{tpu_custom_call.1} parent=1 // pred_region
      %88 = dma.done [#allocation6], 32
    $region33: #{tpu_custom_call.1} parent=1 // pred_fallthru
      _
    // Predicated region
    $region34: #{tpu_custom_call.1} parent=1 // pred_check
      _
    $region35: #{tpu_custom_call.1} parent=1 // pred_check_branch
      %90 = sbr.rel (0) target = $region37
    $region36: #{tpu_custom_call.1} parent=1 // pred_region
      %92 = dma.done [#allocation9], 2048
    $region37: #{tpu_custom_call.1} parent=1 // pred_fallthru
      _
    // Predicated region
    $region38: #{tpu_custom_call.1} parent=1 // pred_check
      _
    $region39: #{tpu_custom_call.1} parent=1 // pred_check_branch
      %94 = sbr.rel (0) target = $region41
    $region40: #{tpu_custom_call.1} parent=1 // pred_region
      %96 = dma.done [#allocation9], 4096
    $region41: #{tpu_custom_call.1} parent=1 // pred_fallthru
      _
    %p97 = scmp.eq.s32.totalorder 0, 0
    // Predicated region
    $region42: #{tpu_custom_call.1} parent=1 // pred_check
      %p98 = pneg %p97
    $region43: #{tpu_custom_call.1} parent=1 // pred_check_branch
      %100 = sbr.rel (%p98) target = $region45
    $region44: #{tpu_custom_call.1} parent=1 // pred_region
      %v101 = vld [vmem:[#allocation7] sm:$0x3]
      %v103 = vperm.slane %v101, 0
      %v104 = vperm.slane %v101, 1
      %107 = vst [vmem:[#allocation11] sm:$0xff] %v103
      %108 = vst [vmem:[#allocation11 + $0x8] sm:$0xff] %v104
      %109 = vst [vmem:[#allocation11 + $0x10] sm:$0xff] %v103
      %110 = vst [vmem:[#allocation11 + $0x18] sm:$0xff] %v104
      %111 = vst [vmem:[#allocation11 + $0x20] sm:$0xff] %v103
      %112 = vst [vmem:[#allocation11 + $0x28] sm:$0xff] %v104
      %113 = vst [vmem:[#allocation11 + $0x30] sm:$0xff] %v103
      %114 = vst [vmem:[#allocation11 + $0x38] sm:$0xff] %v104
      %115 = vst [vmem:[#allocation11 + $0x40] sm:$0xff] %v103
      %116 = vst [vmem:[#allocation11 + $0x48] sm:$0xff] %v104
      %117 = vst [vmem:[#allocation11 + $0x50] sm:$0xff] %v103
      %118 = vst [vmem:[#allocation11 + $0x58] sm:$0xff] %v104
      %119 = vst [vmem:[#allocation11 + $0x60] sm:$0xff] %v103
      %120 = vst [vmem:[#allocation11 + $0x68] sm:$0xff] %v104
      %121 = vst [vmem:[#allocation11 + $0x70] sm:$0xff] %v103
      %122 = vst [vmem:[#allocation11 + $0x78] sm:$0xff] %v104
      %123 = vst [vmem:[#allocation11 + $0x80] sm:$0xff] %v103
      %124 = vst [vmem:[#allocation11 + $0x88] sm:$0xff] %v104
      %125 = vst [vmem:[#allocation11 + $0x90] sm:$0xff] %v103
      %126 = vst [vmem:[#allocation11 + $0x98] sm:$0xff] %v104
      %127 = vst [vmem:[#allocation11 + $0xa0] sm:$0xff] %v103
      %128 = vst [vmem:[#allocation11 + $0xa8] sm:$0xff] %v104
      %129 = vst [vmem:[#allocation11 + $0xb0] sm:$0xff] %v103
      %130 = vst [vmem:[#allocation11 + $0xb8] sm:$0xff] %v104
      %131 = vst [vmem:[#allocation11 + $0xc0] sm:$0xff] %v103
      %132 = vst [vmem:[#allocation11 + $0xc8] sm:$0xff] %v104
      %133 = vst [vmem:[#allocation11 + $0xd0] sm:$0xff] %v103
      %134 = vst [vmem:[#allocation11 + $0xd8] sm:$0xff] %v104
      %135 = vst [vmem:[#allocation11 + $0xe0] sm:$0xff] %v103
      %136 = vst [vmem:[#allocation11 + $0xe8] sm:$0xff] %v104
      %137 = vst [vmem:[#allocation11 + $0xf0] sm:$0xff] %v103
      %138 = vst [vmem:[#allocation11 + $0xf8] sm:$0xff] %v104
    $region45: #{tpu_custom_call.1} parent=1 // pred_fallthru
      _
    %v139 = vld [vmem:[#allocation11] sm:$0xff]
    %v140 = vld [vmem:[#allocation11 + $0x8] sm:$0xff]
    %v141 = vld [vmem:[#allocation11 + $0x10] sm:$0xff]
    %v142 = vld [vmem:[#allocation11 + $0x18] sm:$0xff]
    %v143 = vld [vmem:[#allocation11 + $0x20] sm:$0xff]
    %v144 = vld [vmem:[#allocation11 + $0x28] sm:$0xff]
    %v145 = vld [vmem:[#allocation11 + $0x30] sm:$0xff]
    %v146 = vld [vmem:[#allocation11 + $0x38] sm:$0xff]
    %v147 = vld [vmem:[#allocation11 + $0x40] sm:$0xff]
    %v148 = vld [vmem:[#allocation11 + $0x48] sm:$0xff]
    %v149 = vld [vmem:[#allocation11 + $0x50] sm:$0xff]
    %v150 = vld [vmem:[#allocation11 + $0x58] sm:$0xff]
    %v151 = vld [vmem:[#allocation11 + $0x60] sm:$0xff]
    %v152 = vld [vmem:[#allocation11 + $0x68] sm:$0xff]
    %v153 = vld [vmem:[#allocation11 + $0x70] sm:$0xff]
    %v154 = vld [vmem:[#allocation11 + $0x78] sm:$0xff]
    %v155 = vld [vmem:[#allocation11 + $0x80] sm:$0xff]
    %v156 = vld [vmem:[#allocation11 + $0x88] sm:$0xff]
    %v157 = vld [vmem:[#allocation11 + $0x90] sm:$0xff]
    %v158 = vld [vmem:[#allocation11 + $0x98] sm:$0xff]
    %v159 = vld [vmem:[#allocation11 + $0xa0] sm:$0xff]
    %v160 = vld [vmem:[#allocation11 + $0xa8] sm:$0xff]
    %v161 = vld [vmem:[#allocation11 + $0xb0] sm:$0xff]
    %v162 = vld [vmem:[#allocation11 + $0xb8] sm:$0xff]
    %v163 = vld [vmem:[#allocation11 + $0xc0] sm:$0xff]
    %v164 = vld [vmem:[#allocation11 + $0xc8] sm:$0xff]
    %v165 = vld [vmem:[#allocation11 + $0xd0] sm:$0xff]
    %v166 = vld [vmem:[#allocation11 + $0xd8] sm:$0xff]
    %v167 = vld [vmem:[#allocation11 + $0xe0] sm:$0xff]
    %v168 = vld [vmem:[#allocation11 + $0xe8] sm:$0xff]
    %v169 = vld [vmem:[#allocation11 + $0xf0] sm:$0xff]
    %v170 = vld [vmem:[#allocation11 + $0xf8] sm:$0xff]
    %v171 = vld [vmem:[#allocation2] sm:$0xff]
    %v172 = vld [vmem:[#allocation2 + $0x8] sm:$0xff]
    %v173 = vld [vmem:[#allocation2 + $0x10] sm:$0xff]
    %v174 = vld [vmem:[#allocation2 + $0x18] sm:$0xff]
    %v175 = vld [vmem:[#allocation2 + $0x20] sm:$0xff]
    %v176 = vld [vmem:[#allocation2 + $0x28] sm:$0xff]
    %v177 = vld [vmem:[#allocation2 + $0x30] sm:$0xff]
    %v178 = vld [vmem:[#allocation2 + $0x38] sm:$0xff]
    %v179 = vld [vmem:[#allocation2 + $0x40] sm:$0xff]
    %v180 = vld [vmem:[#allocation2 + $0x48] sm:$0xff]
    %v181 = vld [vmem:[#allocation2 + $0x50] sm:$0xff]
    %v182 = vld [vmem:[#allocation2 + $0x58] sm:$0xff]
    %v183 = vld [vmem:[#allocation2 + $0x60] sm:$0xff]
    %v184 = vld [vmem:[#allocation2 + $0x68] sm:$0xff]
    %v185 = vld [vmem:[#allocation2 + $0x70] sm:$0xff]
    %v186 = vld [vmem:[#allocation2 + $0x78] sm:$0xff]
    %v187 = vld [vmem:[#allocation2 + $0x80] sm:$0xff]
    %v188 = vld [vmem:[#allocation2 + $0x88] sm:$0xff]
    %v189 = vld [vmem:[#allocation2 + $0x90] sm:$0xff]
    %v190 = vld [vmem:[#allocation2 + $0x98] sm:$0xff]
    %v191 = vld [vmem:[#allocation2 + $0xa0] sm:$0xff]
    %v192 = vld [vmem:[#allocation2 + $0xa8] sm:$0xff]
    %v193 = vld [vmem:[#allocation2 + $0xb0] sm:$0xff]
    %v194 = vld [vmem:[#allocation2 + $0xb8] sm:$0xff]
    %v195 = vld [vmem:[#allocation2 + $0xc0] sm:$0xff]
    %v196 = vld [vmem:[#allocation2 + $0xc8] sm:$0xff]
    %v197 = vld [vmem:[#allocation2 + $0xd0] sm:$0xff]
    %v198 = vld [vmem:[#allocation2 + $0xd8] sm:$0xff]
    %v199 = vld [vmem:[#allocation2 + $0xe0] sm:$0xff]
    %v200 = vld [vmem:[#allocation2 + $0xe8] sm:$0xff]
    %v201 = vld [vmem:[#allocation2 + $0xf0] sm:$0xff]
    %v202 = vld [vmem:[#allocation2 + $0xf8] sm:$0xff]
    %v203 = vld [vmem:[#allocation5] sm:$0xff]
    %v204 = vld [vmem:[#allocation5 + $0x8] sm:$0xff]
    %v205 = vld [vmem:[#allocation5 + $0x10] sm:$0xff]
    %v206 = vld [vmem:[#allocation5 + $0x18] sm:$0xff]
    %v207 = vld [vmem:[#allocation5 + $0x20] sm:$0xff]
    %v208 = vld [vmem:[#allocation5 + $0x28] sm:$0xff]
    %v209 = vld [vmem:[#allocation5 + $0x30] sm:$0xff]
    %v210 = vld [vmem:[#allocation5 + $0x38] sm:$0xff]
    %v211 = vld [vmem:[#allocation5 + $0x40] sm:$0xff]
    %v212 = vld [vmem:[#allocation5 + $0x48] sm:$0xff]
    %v213 = vld [vmem:[#allocation5 + $0x50] sm:$0xff]
    %v214 = vld [vmem:[#allocation5 + $0x58] sm:$0xff]
    %v215 = vld [vmem:[#allocation5 + $0x60] sm:$0xff]
    %v216 = vld [vmem:[#allocation5 + $0x68] sm:$0xff]
    %v217 = vld [vmem:[#allocation5 + $0x70] sm:$0xff]
    %v218 = vld [vmem:[#allocation5 + $0x78] sm:$0xff]
    %v219 = vld [vmem:[#allocation5 + $0x80] sm:$0xff]
    %v220 = vld [vmem:[#allocation5 + $0x88] sm:$0xff]
    %v221 = vld [vmem:[#allocation5 + $0x90] sm:$0xff]
    %v222 = vld [vmem:[#allocation5 + $0x98] sm:$0xff]
    %v223 = vld [vmem:[#allocation5 + $0xa0] sm:$0xff]
    %v224 = vld [vmem:[#allocation5 + $0xa8] sm:$0xff]
    %v225 = vld [vmem:[#allocation5 + $0xb0] sm:$0xff]
    %v226 = vld [vmem:[#allocation5 + $0xb8] sm:$0xff]
    %v227 = vld [vmem:[#allocation5 + $0xc0] sm:$0xff]
    %v228 = vld [vmem:[#allocation5 + $0xc8] sm:$0xff]
    %v229 = vld [vmem:[#allocation5 + $0xd0] sm:$0xff]
    %v230 = vld [vmem:[#allocation5 + $0xd8] sm:$0xff]
    %v231 = vld [vmem:[#allocation5 + $0xe0] sm:$0xff]
    %v232 = vld [vmem:[#allocation5 + $0xe8] sm:$0xff]
    %v233 = vld [vmem:[#allocation5 + $0xf0] sm:$0xff]
    %v234 = vld [vmem:[#allocation5 + $0xf8] sm:$0xff]
    %v235 = vld [vmem:[#allocation5 + $0x100] sm:$0xff]
    %v236 = vld [vmem:[#allocation5 + $0x108] sm:$0xff]
    %v237 = vld [vmem:[#allocation5 + $0x110] sm:$0xff]
    %v238 = vld [vmem:[#allocation5 + $0x118] sm:$0xff]
    %v239 = vld [vmem:[#allocation5 + $0x120] sm:$0xff]
    %v240 = vld [vmem:[#allocation5 + $0x128] sm:$0xff]
    %v241 = vld [vmem:[#allocation5 + $0x130] sm:$0xff]
    %v242 = vld [vmem:[#allocation5 + $0x138] sm:$0xff]
    %v243 = vld [vmem:[#allocation5 + $0x140] sm:$0xff]
    %v244 = vld [vmem:[#allocation5 + $0x148] sm:$0xff]
    %v245 = vld [vmem:[#allocation5 + $0x150] sm:$0xff]
    %v246 = vld [vmem:[#allocation5 + $0x158] sm:$0xff]
    %v247 = vld [vmem:[#allocation5 + $0x160] sm:$0xff]
    %v248 = vld [vmem:[#allocation5 + $0x168] sm:$0xff]
    %v249 = vld [vmem:[#allocation5 + $0x170] sm:$0xff]
    %v250 = vld [vmem:[#allocation5 + $0x178] sm:$0xff]
    %v251 = vld [vmem:[#allocation5 + $0x180] sm:$0xff]
    %v252 = vld [vmem:[#allocation5 + $0x188] sm:$0xff]
    %v253 = vld [vmem:[#allocation5 + $0x190] sm:$0xff]
    %v254 = vld [vmem:[#allocation5 + $0x198] sm:$0xff]
    %v255 = vld [vmem:[#allocation5 + $0x1a0] sm:$0xff]
    %v256 = vld [vmem:[#allocation5 + $0x1a8] sm:$0xff]
    %v257 = vld [vmem:[#allocation5 + $0x1b0] sm:$0xff]
    %v258 = vld [vmem:[#allocation5 + $0x1b8] sm:$0xff]
    %v259 = vld [vmem:[#allocation5 + $0x1c0] sm:$0xff]
    %v260 = vld [vmem:[#allocation5 + $0x1c8] sm:$0xff]
    %v261 = vld [vmem:[#allocation5 + $0x1d0] sm:$0xff]
    %v262 = vld [vmem:[#allocation5 + $0x1d8] sm:$0xff]
    %v263 = vld [vmem:[#allocation5 + $0x1e0] sm:$0xff]
    %v264 = vld [vmem:[#allocation5 + $0x1e8] sm:$0xff]
    %v265 = vld [vmem:[#allocation5 + $0x1f0] sm:$0xff]
    %v266 = vld [vmem:[#allocation5 + $0x1f8] sm:$0xff]
    %267 = vmatpush.msra.mxu0 %v233
    %268 = vmatpush.msra.mxu0 %v231
    %269 = vmatpush.msra.mxu0 %v229
    %270 = vmatpush.msra.mxu0 %v227
    %271 = vmatpush.msra.mxu0 %v225
    %272 = vmatpush.msra.mxu0 %v223
    %273 = vmatpush.msra.mxu0 %v221
    %274 = vmatpush.msra.mxu0 %v219
    %275 = vmatpush.msra.mxu0 %v217
    %276 = vmatpush.msra.mxu0 %v215
    %277 = vmatpush.msra.mxu0 %v213
    %278 = vmatpush.msra.mxu0 %v211
    %279 = vmatpush.msra.mxu0 %v209
    %280 = vmatpush.msra.mxu0 %v207
    %281 = vmatpush.msra.mxu0 %v205
    %282 = vmatpush.msra.mxu0 %v203
    %283 = vmatmul.f32.gmra.mxu0 %v171
    %v284 = vpop.f32.mrf.mxu0
    %v285 = vadd.f32 0.0, %v284
    %286 = vmatmul.f32.gmra.mxu0 %v173
    %v287 = vpop.f32.mrf.mxu0
    %v288 = vadd.f32 0.0, %v287
    %289 = vmatmul.f32.gmra.mxu0 %v175
    %v290 = vpop.f32.mrf.mxu0
    %v291 = vadd.f32 0.0, %v290
    %292 = vmatmul.f32.gmra.mxu0 %v177
    %v293 = vpop.f32.mrf.mxu0
    %v294 = vadd.f32 0.0, %v293
    %295 = vmatmul.f32.gmra.mxu0 %v179
    %v296 = vpop.f32.mrf.mxu0
    %v297 = vadd.f32 0.0, %v296
    %298 = vmatmul.f32.gmra.mxu0 %v181
    %v299 = vpop.f32.mrf.mxu0
    %v300 = vadd.f32 0.0, %v299
    %301 = vmatmul.f32.gmra.mxu0 %v183
    %v302 = vpop.f32.mrf.mxu0
    %v303 = vadd.f32 0.0, %v302
    %304 = vmatmul.f32.gmra.mxu0 %v185
    %v305 = vpop.f32.mrf.mxu0
    %v306 = vadd.f32 0.0, %v305
    %307 = vmatmul.f32.gmra.mxu0 %v187
    %v308 = vpop.f32.mrf.mxu0
    %v309 = vadd.f32 0.0, %v308
    %310 = vmatmul.f32.gmra.mxu0 %v189
    %v311 = vpop.f32.mrf.mxu0
    %v312 = vadd.f32 0.0, %v311
    %313 = vmatmul.f32.gmra.mxu0 %v191
    %v314 = vpop.f32.mrf.mxu0
    %v315 = vadd.f32 0.0, %v314
    %316 = vmatmul.f32.gmra.mxu0 %v193
    %v317 = vpop.f32.mrf.mxu0
    %v318 = vadd.f32 0.0, %v317
    %319 = vmatmul.f32.gmra.mxu0 %v195
    %v320 = vpop.f32.mrf.mxu0
    %v321 = vadd.f32 0.0, %v320
    %322 = vmatmul.f32.gmra.mxu0 %v197
    %v323 = vpop.f32.mrf.mxu0
    %v324 = vadd.f32 0.0, %v323
    %325 = vmatmul.f32.gmra.mxu0 %v199
    %v326 = vpop.f32.mrf.mxu0
    %v327 = vadd.f32 0.0, %v326
    %328 = vmatmul.f32.gmra.mxu0 %v201
    %v329 = vpop.f32.mrf.mxu0
    %v330 = vadd.f32 0.0, %v329
    %331 = vdwg.mxu0
    %332 = vmatpush.msra.mxu0 %v265
    %333 = vmatpush.msra.mxu0 %v263
    %334 = vmatpush.msra.mxu0 %v261
    %335 = vmatpush.msra.mxu0 %v259
    %336 = vmatpush.msra.mxu0 %v257
    %337 = vmatpush.msra.mxu0 %v255
    %338 = vmatpush.msra.mxu0 %v253
    %339 = vmatpush.msra.mxu0 %v251
    %340 = vmatpush.msra.mxu0 %v249
    %341 = vmatpush.msra.mxu0 %v247
    %342 = vmatpush.msra.mxu0 %v245
    %343 = vmatpush.msra.mxu0 %v243
    %344 = vmatpush.msra.mxu0 %v241
    %345 = vmatpush.msra.mxu0 %v239
    %346 = vmatpush.msra.mxu0 %v237
    %347 = vmatpush.msra.mxu0 %v235
    %348 = vmatmul.f32.gmra.mxu0 %v172
    %v349 = vpop.f32.mrf.mxu0
    %v350 = vadd.f32 %v285, %v349
    %351 = vmatmul.f32.gmra.mxu0 %v174
    %v352 = vpop.f32.mrf.mxu0
    %v353 = vadd.f32 %v288, %v352
    %354 = vmatmul.f32.gmra.mxu0 %v176
    %v355 = vpop.f32.mrf.mxu0
    %v356 = vadd.f32 %v291, %v355
    %357 = vmatmul.f32.gmra.mxu0 %v178
    %v358 = vpop.f32.mrf.mxu0
    %v359 = vadd.f32 %v294, %v358
    %360 = vmatmul.f32.gmra.mxu0 %v180
    %v361 = vpop.f32.mrf.mxu0
    %v362 = vadd.f32 %v297, %v361
    %363 = vmatmul.f32.gmra.mxu0 %v182
    %v364 = vpop.f32.mrf.mxu0
    %v365 = vadd.f32 %v300, %v364
    %366 = vmatmul.f32.gmra.mxu0 %v184
    %v367 = vpop.f32.mrf.mxu0
    %v368 = vadd.f32 %v303, %v367
    %369 = vmatmul.f32.gmra.mxu0 %v186
    %v370 = vpop.f32.mrf.mxu0
    %v371 = vadd.f32 %v306, %v370
    %372 = vmatmul.f32.gmra.mxu0 %v188
    %v373 = vpop.f32.mrf.mxu0
    %v374 = vadd.f32 %v309, %v373
    %375 = vmatmul.f32.gmra.mxu0 %v190
    %v376 = vpop.f32.mrf.mxu0
    %v377 = vadd.f32 %v312, %v376
    %378 = vmatmul.f32.gmra.mxu0 %v192
    %v379 = vpop.f32.mrf.mxu0
    %v380 = vadd.f32 %v315, %v379
    %381 = vmatmul.f32.gmra.mxu0 %v194
    %v382 = vpop.f32.mrf.mxu0
    %v383 = vadd.f32 %v318, %v382
    %384 = vmatmul.f32.gmra.mxu0 %v196
    %v385 = vpop.f32.mrf.mxu0
    %v386 = vadd.f32 %v321, %v385
    %387 = vmatmul.f32.gmra.mxu0 %v198
    %v388 = vpop.f32.mrf.mxu0
    %v389 = vadd.f32 %v324, %v388
    %390 = vmatmul.f32.gmra.mxu0 %v200
    %v391 = vpop.f32.mrf.mxu0
    %v392 = vadd.f32 %v327, %v391
    %393 = vmatmul.f32.gmra.mxu0 %v202
    %v394 = vpop.f32.mrf.mxu0
    %v395 = vadd.f32 %v330, %v394
    %396 = vdwg.mxu0
    %397 = vmatpush.msra.mxu0 %v234
    %398 = vmatpush.msra.mxu0 %v232
    %399 = vmatpush.msra.mxu0 %v230
    %400 = vmatpush.msra.mxu0 %v228
    %401 = vmatpush.msra.mxu0 %v226
    %402 = vmatpush.msra.mxu0 %v224
    %403 = vmatpush.msra.mxu0 %v222
    %404 = vmatpush.msra.mxu0 %v220
    %405 = vmatpush.msra.mxu0 %v218
    %406 = vmatpush.msra.mxu0 %v216
    %407 = vmatpush.msra.mxu0 %v214
    %408 = vmatpush.msra.mxu0 %v212
    %409 = vmatpush.msra.mxu0 %v210
    %410 = vmatpush.msra.mxu0 %v208
    %411 = vmatpush.msra.mxu0 %v206
    %412 = vmatpush.msra.mxu0 %v204
    %413 = vmatmul.f32.gmra.mxu0 %v171
    %v414 = vpop.f32.mrf.mxu0
    %v415 = vadd.f32 0.0, %v414
    %416 = vmatmul.f32.gmra.mxu0 %v173
    %v417 = vpop.f32.mrf.mxu0
    %v418 = vadd.f32 0.0, %v417
    %419 = vmatmul.f32.gmra.mxu0 %v175
    %v420 = vpop.f32.mrf.mxu0
    %v421 = vadd.f32 0.0, %v420
    %422 = vmatmul.f32.gmra.mxu0 %v177
    %v423 = vpop.f32.mrf.mxu0
    %v424 = vadd.f32 0.0, %v423
    %425 = vmatmul.f32.gmra.mxu0 %v179
    %v426 = vpop.f32.mrf.mxu0
    %v427 = vadd.f32 0.0, %v426
    %428 = vmatmul.f32.gmra.mxu0 %v181
    %v429 = vpop.f32.mrf.mxu0
    %v430 = vadd.f32 0.0, %v429
    %431 = vmatmul.f32.gmra.mxu0 %v183
    %v432 = vpop.f32.mrf.mxu0
    %v433 = vadd.f32 0.0, %v432
    %434 = vmatmul.f32.gmra.mxu0 %v185
    %v435 = vpop.f32.mrf.mxu0
    %v436 = vadd.f32 0.0, %v435
    %437 = vmatmul.f32.gmra.mxu0 %v187
    %v438 = vpop.f32.mrf.mxu0
    %v439 = vadd.f32 0.0, %v438
    %440 = vmatmul.f32.gmra.mxu0 %v189
    %v441 = vpop.f32.mrf.mxu0
    %v442 = vadd.f32 0.0, %v441
    %443 = vmatmul.f32.gmra.mxu0 %v191
    %v444 = vpop.f32.mrf.mxu0
    %v445 = vadd.f32 0.0, %v444
    %446 = vmatmul.f32.gmra.mxu0 %v193
    %v447 = vpop.f32.mrf.mxu0
    %v448 = vadd.f32 0.0, %v447
    %449 = vmatmul.f32.gmra.mxu0 %v195
    %v450 = vpop.f32.mrf.mxu0
    %v451 = vadd.f32 0.0, %v450
    %452 = vmatmul.f32.gmra.mxu0 %v197
    %v453 = vpop.f32.mrf.mxu0
    %v454 = vadd.f32 0.0, %v453
    %455 = vmatmul.f32.gmra.mxu0 %v199
    %v456 = vpop.f32.mrf.mxu0
    %v457 = vadd.f32 0.0, %v456
    %458 = vmatmul.f32.gmra.mxu0 %v201
    %v459 = vpop.f32.mrf.mxu0
    %v460 = vadd.f32 0.0, %v459
    %461 = vdwg.mxu0
    %462 = vmatpush.msra.mxu0 %v266
    %463 = vmatpush.msra.mxu0 %v264
    %464 = vmatpush.msra.mxu0 %v262
    %465 = vmatpush.msra.mxu0 %v260
    %466 = vmatpush.msra.mxu0 %v258
    %467 = vmatpush.msra.mxu0 %v256
    %468 = vmatpush.msra.mxu0 %v254
    %469 = vmatpush.msra.mxu0 %v252
    %470 = vmatpush.msra.mxu0 %v250
    %471 = vmatpush.msra.mxu0 %v248
    %472 = vmatpush.msra.mxu0 %v246
    %473 = vmatpush.msra.mxu0 %v244
    %474 = vmatpush.msra.mxu0 %v242
    %475 = vmatpush.msra.mxu0 %v240
    %476 = vmatpush.msra.mxu0 %v238
    %477 = vmatpush.msra.mxu0 %v236
    %478 = vmatmul.f32.gmra.mxu0 %v172
    %v479 = vpop.f32.mrf.mxu0
    %v480 = vadd.f32 %v415, %v479
    %481 = vmatmul.f32.gmra.mxu0 %v174
    %v482 = vpop.f32.mrf.mxu0
    %v483 = vadd.f32 %v418, %v482
    %484 = vmatmul.f32.gmra.mxu0 %v176
    %v485 = vpop.f32.mrf.mxu0
    %v486 = vadd.f32 %v421, %v485
    %487 = vmatmul.f32.gmra.mxu0 %v178
    %v488 = vpop.f32.mrf.mxu0
    %v489 = vadd.f32 %v424, %v488
    %490 = vmatmul.f32.gmra.mxu0 %v180
    %v491 = vpop.f32.mrf.mxu0
    %v492 = vadd.f32 %v427, %v491
    %493 = vmatmul.f32.gmra.mxu0 %v182
    %v494 = vpop.f32.mrf.mxu0
    %v495 = vadd.f32 %v430, %v494
    %496 = vmatmul.f32.gmra.mxu0 %v184
    %v497 = vpop.f32.mrf.mxu0
    %v498 = vadd.f32 %v433, %v497
    %499 = vmatmul.f32.gmra.mxu0 %v186
    %v500 = vpop.f32.mrf.mxu0
    %v501 = vadd.f32 %v436, %v500
    %502 = vmatmul.f32.gmra.mxu0 %v188
    %v503 = vpop.f32.mrf.mxu0
    %v504 = vadd.f32 %v439, %v503
    %505 = vmatmul.f32.gmra.mxu0 %v190
    %v506 = vpop.f32.mrf.mxu0
    %v507 = vadd.f32 %v442, %v506
    %508 = vmatmul.f32.gmra.mxu0 %v192
    %v509 = vpop.f32.mrf.mxu0
    %v510 = vadd.f32 %v445, %v509
    %511 = vmatmul.f32.gmra.mxu0 %v194
    %v512 = vpop.f32.mrf.mxu0
    %v513 = vadd.f32 %v448, %v512
    %514 = vmatmul.f32.gmra.mxu0 %v196
    %v515 = vpop.f32.mrf.mxu0
    %v516 = vadd.f32 %v451, %v515
    %517 = vmatmul.f32.gmra.mxu0 %v198
    %v518 = vpop.f32.mrf.mxu0
    %v519 = vadd.f32 %v454, %v518
    %520 = vmatmul.f32.gmra.mxu0 %v200
    %v521 = vpop.f32.mrf.mxu0
    %v522 = vadd.f32 %v457, %v521
    %523 = vmatmul.f32.gmra.mxu0 %v202
    %v524 = vpop.f32.mrf.mxu0
    %v525 = vadd.f32 %v460, %v524
    %526 = vdwg.mxu0
    %v527 = vadd.f32 %v139, %v350
    %v528 = vadd.f32 %v140, %v480
    %v529 = vadd.f32 %v141, %v353
    %v530 = vadd.f32 %v142, %v483
    %v531 = vadd.f32 %v143, %v356
    %v532 = vadd.f32 %v144, %v486
    %v533 = vadd.f32 %v145, %v359
    %v534 = vadd.f32 %v146, %v489
    %v535 = vadd.f32 %v147, %v362
    %v536 = vadd.f32 %v148, %v492
    %v537 = vadd.f32 %v149, %v365
    %v538 = vadd.f32 %v150, %v495
    %v539 = vadd.f32 %v151, %v368
    %v540 = vadd.f32 %v152, %v498
    %v541 = vadd.f32 %v153, %v371
    %v542 = vadd.f32 %v154, %v501
    %v543 = vadd.f32 %v155, %v374
    %v544 = vadd.f32 %v156, %v504
    %v545 = vadd.f32 %v157, %v377
    %v546 = vadd.f32 %v158, %v507
    %v547 = vadd.f32 %v159, %v380
    %v548 = vadd.f32 %v160, %v510
    %v549 = vadd.f32 %v161, %v383
    %v550 = vadd.f32 %v162, %v513
    %v551 = vadd.f32 %v163, %v386
    %v552 = vadd.f32 %v164, %v516
    %v553 = vadd.f32 %v165, %v389
    %v554 = vadd.f32 %v166, %v519
    %v555 = vadd.f32 %v167, %v392
    %v556 = vadd.f32 %v168, %v522
    %v557 = vadd.f32 %v169, %v395
    %v558 = vadd.f32 %v170, %v525
    %559 = vst [vmem:[#allocation11] sm:$0xff] %v527
    %560 = vst [vmem:[#allocation11 + $0x8] sm:$0xff] %v528
    %561 = vst [vmem:[#allocation11 + $0x10] sm:$0xff] %v529
    %562 = vst [vmem:[#allocation11 + $0x18] sm:$0xff] %v530
    %563 = vst [vmem:[#allocation11 + $0x20] sm:$0xff] %v531
    %564 = vst [vmem:[#allocation11 + $0x28] sm:$0xff] %v532
    %565 = vst [vmem:[#allocation11 + $0x30] sm:$0xff] %v533
    %566 = vst [vmem:[#allocation11 + $0x38] sm:$0xff] %v534
    %567 = vst [vmem:[#allocation11 + $0x40] sm:$0xff] %v535
    %568 = vst [vmem:[#allocation11 + $0x48] sm:$0xff] %v536
    %569 = vst [vmem:[#allocation11 + $0x50] sm:$0xff] %v537
    %570 = vst [vmem:[#allocation11 + $0x58] sm:$0xff] %v538
    %571 = vst [vmem:[#allocation11 + $0x60] sm:$0xff] %v539
    %572 = vst [vmem:[#allocation11 + $0x68] sm:$0xff] %v540
    %573 = vst [vmem:[#allocation11 + $0x70] sm:$0xff] %v541
    %574 = vst [vmem:[#allocation11 + $0x78] sm:$0xff] %v542
    %575 = vst [vmem:[#allocation11 + $0x80] sm:$0xff] %v543
    %576 = vst [vmem:[#allocation11 + $0x88] sm:$0xff] %v544
    %577 = vst [vmem:[#allocation11 + $0x90] sm:$0xff] %v545
    %578 = vst [vmem:[#allocation11 + $0x98] sm:$0xff] %v546
    %579 = vst [vmem:[#allocation11 + $0xa0] sm:$0xff] %v547
    %580 = vst [vmem:[#allocation11 + $0xa8] sm:$0xff] %v548
    %581 = vst [vmem:[#allocation11 + $0xb0] sm:$0xff] %v549
    %582 = vst [vmem:[#allocation11 + $0xb8] sm:$0xff] %v550
    %583 = vst [vmem:[#allocation11 + $0xc0] sm:$0xff] %v551
    %584 = vst [vmem:[#allocation11 + $0xc8] sm:$0xff] %v552
    %585 = vst [vmem:[#allocation11 + $0xd0] sm:$0xff] %v553
    %586 = vst [vmem:[#allocation11 + $0xd8] sm:$0xff] %v554
    %587 = vst [vmem:[#allocation11 + $0xe0] sm:$0xff] %v555
    %588 = vst [vmem:[#allocation11 + $0xe8] sm:$0xff] %v556
    %589 = vst [vmem:[#allocation11 + $0xf0] sm:$0xff] %v557
    %590 = vst [vmem:[#allocation11 + $0xf8] sm:$0xff] %v558
    // Predicated region
    $region46: #{tpu_custom_call.1} parent=1 // pred_check
      %p591 = pneg %p97
    $region47: #{tpu_custom_call.1} parent=1 // pred_check_branch
      %593 = sbr.rel (%p591) target = $region49
    $region48: #{tpu_custom_call.1} parent=1 // pred_region
      %v594 = vld [vmem:[#allocation11] sm:$0xff]
      %v595 = vld [vmem:[#allocation11 + $0x8] sm:$0xff]
      %v596 = vld [vmem:[#allocation11 + $0x10] sm:$0xff]
      %v597 = vld [vmem:[#allocation11 + $0x18] sm:$0xff]
      %v598 = vld [vmem:[#allocation11 + $0x20] sm:$0xff]
      %v599 = vld [vmem:[#allocation11 + $0x28] sm:$0xff]
      %v600 = vld [vmem:[#allocation11 + $0x30] sm:$0xff]
      %v601 = vld [vmem:[#allocation11 + $0x38] sm:$0xff]
      %v602 = vld [vmem:[#allocation11 + $0x40] sm:$0xff]
      %v603 = vld [vmem:[#allocation11 + $0x48] sm:$0xff]
      %v604 = vld [vmem:[#allocation11 + $0x50] sm:$0xff]
      %v605 = vld [vmem:[#allocation11 + $0x58] sm:$0xff]
      %v606 = vld [vmem:[#allocation11 + $0x60] sm:$0xff]
      %v607 = vld [vmem:[#allocation11 + $0x68] sm:$0xff]
      %v608 = vld [vmem:[#allocation11 + $0x70] sm:$0xff]
      %v609 = vld [vmem:[#allocation11 + $0x78] sm:$0xff]
      %v610 = vld [vmem:[#allocation11 + $0x80] sm:$0xff]
      %v611 = vld [vmem:[#allocation11 + $0x88] sm:$0xff]
      %v612 = vld [vmem:[#allocation11 + $0x90] sm:$0xff]
      %v613 = vld [vmem:[#allocation11 + $0x98] sm:$0xff]
      %v614 = vld [vmem:[#allocation11 + $0xa0] sm:$0xff]
      %v615 = vld [vmem:[#allocation11 + $0xa8] sm:$0xff]
      %v616 = vld [vmem:[#allocation11 + $0xb0] sm:$0xff]
      %v617 = vld [vmem:[#allocation11 + $0xb8] sm:$0xff]
      %v618 = vld [vmem:[#allocation11 + $0xc0] sm:$0xff]
      %v619 = vld [vmem:[#allocation11 + $0xc8] sm:$0xff]
      %v620 = vld [vmem:[#allocation11 + $0xd0] sm:$0xff]
      %v621 = vld [vmem:[#allocation11 + $0xd8] sm:$0xff]
      %v622 = vld [vmem:[#allocation11 + $0xe0] sm:$0xff]
      %v623 = vld [vmem:[#allocation11 + $0xe8] sm:$0xff]
      %v624 = vld [vmem:[#allocation11 + $0xf0] sm:$0xff]
      %v625 = vld [vmem:[#allocation11 + $0xf8] sm:$0xff]
      %v626 = vld [vmem:[#allocation8] sm:$0xff]
      %v627 = vld [vmem:[#allocation8 + $0x8] sm:$0xff]
      %v628 = vld [vmem:[#allocation8 + $0x10] sm:$0xff]
      %v629 = vld [vmem:[#allocation8 + $0x18] sm:$0xff]
      %v630 = vld [vmem:[#allocation8 + $0x20] sm:$0xff]
      %v631 = vld [vmem:[#allocation8 + $0x28] sm:$0xff]
      %v632 = vld [vmem:[#allocation8 + $0x30] sm:$0xff]
      %v633 = vld [vmem:[#allocation8 + $0x38] sm:$0xff]
      %v634 = vld [vmem:[#allocation8 + $0x40] sm:$0xff]
      %v635 = vld [vmem:[#allocation8 + $0x48] sm:$0xff]
      %v636 = vld [vmem:[#allocation8 + $0x50] sm:$0xff]
      %v637 = vld [vmem:[#allocation8 + $0x58] sm:$0xff]
      %v638 = vld [vmem:[#allocation8 + $0x60] sm:$0xff]
      %v639 = vld [vmem:[#allocation8 + $0x68] sm:$0xff]
      %v640 = vld [vmem:[#allocation8 + $0x70] sm:$0xff]
      %v641 = vld [vmem:[#allocation8 + $0x78] sm:$0xff]
      %v642 = vld [vmem:[#allocation10] sm:$0xff]
      %v643 = vld [vmem:[#allocation10 + $0x8] sm:$0xff]
      %v644 = vld [vmem:[#allocation10 + $0x10] sm:$0xff]
      %v645 = vld [vmem:[#allocation10 + $0x18] sm:$0xff]
      %v646 = vld [vmem:[#allocation10 + $0x20] sm:$0xff]
      %v647 = vld [vmem:[#allocation10 + $0x28] sm:$0xff]
      %v648 = vld [vmem:[#allocation10 + $0x30] sm:$0xff]
      %v649 = vld [vmem:[#allocation10 + $0x38] sm:$0xff]
      %v650 = vld [vmem:[#allocation10 + $0x40] sm:$0xff]
      %v651 = vld [vmem:[#allocation10 + $0x48] sm:$0xff]
      %v652 = vld [vmem:[#allocation10 + $0x50] sm:$0xff]
      %v653 = vld [vmem:[#allocation10 + $0x58] sm:$0xff]
      %v654 = vld [vmem:[#allocation10 + $0x60] sm:$0xff]
      %v655 = vld [vmem:[#allocation10 + $0x68] sm:$0xff]
      %v656 = vld [vmem:[#allocation10 + $0x70] sm:$0xff]
      %v657 = vld [vmem:[#allocation10 + $0x78] sm:$0xff]
      %v658 = vld [vmem:[#allocation10 + $0x80] sm:$0xff]
      %v659 = vld [vmem:[#allocation10 + $0x88] sm:$0xff]
      %v660 = vld [vmem:[#allocation10 + $0x90] sm:$0xff]
      %v661 = vld [vmem:[#allocation10 + $0x98] sm:$0xff]
      %v662 = vld [vmem:[#allocation10 + $0xa0] sm:$0xff]
      %v663 = vld [vmem:[#allocation10 + $0xa8] sm:$0xff]
      %v664 = vld [vmem:[#allocation10 + $0xb0] sm:$0xff]
      %v665 = vld [vmem:[#allocation10 + $0xb8] sm:$0xff]
      %v666 = vld [vmem:[#allocation10 + $0xc0] sm:$0xff]
      %v667 = vld [vmem:[#allocation10 + $0xc8] sm:$0xff]
      %v668 = vld [vmem:[#allocation10 + $0xd0] sm:$0xff]
      %v669 = vld [vmem:[#allocation10 + $0xd8] sm:$0xff]
      %v670 = vld [vmem:[#allocation10 + $0xe0] sm:$0xff]
      %v671 = vld [vmem:[#allocation10 + $0xe8] sm:$0xff]
      %v672 = vld [vmem:[#allocation10 + $0xf0] sm:$0xff]
      %v673 = vld [vmem:[#allocation10 + $0xf8] sm:$0xff]
      %674 = vmatpush.msra.mxu0 %v672
      %675 = vmatpush.msra.mxu0 %v670
      %676 = vmatpush.msra.mxu0 %v668
      %677 = vmatpush.msra.mxu0 %v666
      %678 = vmatpush.msra.mxu0 %v664
      %679 = vmatpush.msra.mxu0 %v662
      %680 = vmatpush.msra.mxu0 %v660
      %681 = vmatpush.msra.mxu0 %v658
      %682 = vmatpush.msra.mxu0 %v656
      %683 = vmatpush.msra.mxu0 %v654
      %684 = vmatpush.msra.mxu0 %v652
      %685 = vmatpush.msra.mxu0 %v650
      %686 = vmatpush.msra.mxu0 %v648
      %687 = vmatpush.msra.mxu0 %v646
      %688 = vmatpush.msra.mxu0 %v644
      %689 = vmatpush.msra.mxu0 %v642
      %690 = vmatmul.f32.gmra.mxu0 %v626
      %v691 = vpop.f32.mrf.mxu0
      %v692 = vadd.f32 0.0, %v691
      %693 = vmatmul.f32.gmra.mxu0 %v627
      %v694 = vpop.f32.mrf.mxu0
      %v695 = vadd.f32 0.0, %v694
      %696 = vmatmul.f32.gmra.mxu0 %v628
      %v697 = vpop.f32.mrf.mxu0
      %v698 = vadd.f32 0.0, %v697
      %699 = vmatmul.f32.gmra.mxu0 %v629
      %v700 = vpop.f32.mrf.mxu0
      %v701 = vadd.f32 0.0, %v700
      %702 = vmatmul.f32.gmra.mxu0 %v630
      %v703 = vpop.f32.mrf.mxu0
      %v704 = vadd.f32 0.0, %v703
      %705 = vmatmul.f32.gmra.mxu0 %v631
      %v706 = vpop.f32.mrf.mxu0
      %v707 = vadd.f32 0.0, %v706
      %708 = vmatmul.f32.gmra.mxu0 %v632
      %v709 = vpop.f32.mrf.mxu0
      %v710 = vadd.f32 0.0, %v709
      %711 = vmatmul.f32.gmra.mxu0 %v633
      %v712 = vpop.f32.mrf.mxu0
      %v713 = vadd.f32 0.0, %v712
      %714 = vmatmul.f32.gmra.mxu0 %v634
      %v715 = vpop.f32.mrf.mxu0
      %v716 = vadd.f32 0.0, %v715
      %717 = vmatmul.f32.gmra.mxu0 %v635
      %v718 = vpop.f32.mrf.mxu0
      %v719 = vadd.f32 0.0, %v718
      %720 = vmatmul.f32.gmra.mxu0 %v636
      %v721 = vpop.f32.mrf.mxu0
      %v722 = vadd.f32 0.0, %v721
      %723 = vmatmul.f32.gmra.mxu0 %v637
      %v724 = vpop.f32.mrf.mxu0
      %v725 = vadd.f32 0.0, %v724
      %726 = vmatmul.f32.gmra.mxu0 %v638
      %v727 = vpop.f32.mrf.mxu0
      %v728 = vadd.f32 0.0, %v727
      %729 = vmatmul.f32.gmra.mxu0 %v639
      %v730 = vpop.f32.mrf.mxu0
      %v731 = vadd.f32 0.0, %v730
      %732 = vmatmul.f32.gmra.mxu0 %v640
      %v733 = vpop.f32.mrf.mxu0
      %v734 = vadd.f32 0.0, %v733
      %735 = vmatmul.f32.gmra.mxu0 %v641
      %v736 = vpop.f32.mrf.mxu0
      %v737 = vadd.f32 0.0, %v736
      %738 = vdwg.mxu0
      %739 = vmatpush.msra.mxu0 %v673
      %740 = vmatpush.msra.mxu0 %v671
      %741 = vmatpush.msra.mxu0 %v669
      %742 = vmatpush.msra.mxu0 %v667
      %743 = vmatpush.msra.mxu0 %v665
      %744 = vmatpush.msra.mxu0 %v663
      %745 = vmatpush.msra.mxu0 %v661
      %746 = vmatpush.msra.mxu0 %v659
      %747 = vmatpush.msra.mxu0 %v657
      %748 = vmatpush.msra.mxu0 %v655
      %749 = vmatpush.msra.mxu0 %v653
      %750 = vmatpush.msra.mxu0 %v651
      %751 = vmatpush.msra.mxu0 %v649
      %752 = vmatpush.msra.mxu0 %v647
      %753 = vmatpush.msra.mxu0 %v645
      %754 = vmatpush.msra.mxu0 %v643
      %755 = vmatmul.f32.gmra.mxu0 %v626
      %v756 = vpop.f32.mrf.mxu0
      %v757 = vadd.f32 0.0, %v756
      %758 = vmatmul.f32.gmra.mxu0 %v627
      %v759 = vpop.f32.mrf.mxu0
      %v760 = vadd.f32 0.0, %v759
      %761 = vmatmul.f32.gmra.mxu0 %v628
      %v762 = vpop.f32.mrf.mxu0
      %v763 = vadd.f32 0.0, %v762
      %764 = vmatmul.f32.gmra.mxu0 %v629
      %v765 = vpop.f32.mrf.mxu0
      %v766 = vadd.f32 0.0, %v765
      %767 = vmatmul.f32.gmra.mxu0 %v630
      %v768 = vpop.f32.mrf.mxu0
      %v769 = vadd.f32 0.0, %v768
      %770 = vmatmul.f32.gmra.mxu0 %v631
      %v771 = vpop.f32.mrf.mxu0
      %v772 = vadd.f32 0.0, %v771
      %773 = vmatmul.f32.gmra.mxu0 %v632
      %v774 = vpop.f32.mrf.mxu0
      %v775 = vadd.f32 0.0, %v774
      %776 = vmatmul.f32.gmra.mxu0 %v633
      %v777 = vpop.f32.mrf.mxu0
      %v778 = vadd.f32 0.0, %v777
      %779 = vmatmul.f32.gmra.mxu0 %v634
      %v780 = vpop.f32.mrf.mxu0
      %v781 = vadd.f32 0.0, %v780
      %782 = vmatmul.f32.gmra.mxu0 %v635
      %v783 = vpop.f32.mrf.mxu0
      %v784 = vadd.f32 0.0, %v783
      %785 = vmatmul.f32.gmra.mxu0 %v636
      %v786 = vpop.f32.mrf.mxu0
      %v787 = vadd.f32 0.0, %v786
      %788 = vmatmul.f32.gmra.mxu0 %v637
      %v789 = vpop.f32.mrf.mxu0
      %v790 = vadd.f32 0.0, %v789
      %791 = vmatmul.f32.gmra.mxu0 %v638
      %v792 = vpop.f32.mrf.mxu0
      %v793 = vadd.f32 0.0, %v792
      %794 = vmatmul.f32.gmra.mxu0 %v639
      %v795 = vpop.f32.mrf.mxu0
      %v796 = vadd.f32 0.0, %v795
      %797 = vmatmul.f32.gmra.mxu0 %v640
      %v798 = vpop.f32.mrf.mxu0
      %v799 = vadd.f32 0.0, %v798
      %800 = vmatmul.f32.gmra.mxu0 %v641
      %v801 = vpop.f32.mrf.mxu0
      %v802 = vadd.f32 0.0, %v801
      %803 = vdwg.mxu0
      %v804 = vadd.f32 %v594, %v692
      %v805 = vadd.f32 %v595, %v757
      %v806 = vadd.f32 %v596, %v695
      %v807 = vadd.f32 %v597, %v760
      %v808 = vadd.f32 %v598, %v698
      %v809 = vadd.f32 %v599, %v763
      %v810 = vadd.f32 %v600, %v701
      %v811 = vadd.f32 %v601, %v766
      %v812 = vadd.f32 %v602, %v704
      %v813 = vadd.f32 %v603, %v769
      %v814 = vadd.f32 %v604, %v707
      %v815 = vadd.f32 %v605, %v772
      %v816 = vadd.f32 %v606, %v710
      %v817 = vadd.f32 %v607, %v775
      %v818 = vadd.f32 %v608, %v713
      %v819 = vadd.f32 %v609, %v778
      %v820 = vadd.f32 %v610, %v716
      %v821 = vadd.f32 %v611, %v781
      %v822 = vadd.f32 %v612, %v719
      %v823 = vadd.f32 %v613, %v784
      %v824 = vadd.f32 %v614, %v722
      %v825 = vadd.f32 %v615, %v787
      %v826 = vadd.f32 %v616, %v725
      %v827 = vadd.f32 %v617, %v790
      %v828 = vadd.f32 %v618, %v728
      %v829 = vadd.f32 %v619, %v793
      %v830 = vadd.f32 %v620, %v731
      %v831 = vadd.f32 %v621, %v796
      %v832 = vadd.f32 %v622, %v734
      %v833 = vadd.f32 %v623, %v799
      %v834 = vadd.f32 %v624, %v737
      %v835 = vadd.f32 %v625, %v802
      %836 = vst [vmem:[#allocation11] sm:$0xff] %v804
      %837 = vst [vmem:[#allocation11 + $0x8] sm:$0xff] %v805
      %838 = vst [vmem:[#allocation11 + $0x10] sm:$0xff] %v806
      %839 = vst [vmem:[#allocation11 + $0x18] sm:$0xff] %v807
      %840 = vst [vmem:[#allocation11 + $0x20] sm:$0xff] %v808
      %841 = vst [vmem:[#allocation11 + $0x28] sm:$0xff] %v809
      %842 = vst [vmem:[#allocation11 + $0x30] sm:$0xff] %v810
      %843 = vst [vmem:[#allocation11 + $0x38] sm:$0xff] %v811
      %844 = vst [vmem:[#allocation11 + $0x40] sm:$0xff] %v812
      %845 = vst [vmem:[#allocation11 + $0x48] sm:$0xff] %v813
      %846 = vst [vmem:[#allocation11 + $0x50] sm:$0xff] %v814
      %847 = vst [vmem:[#allocation11 + $0x58] sm:$0xff] %v815
      %848 = vst [vmem:[#allocation11 + $0x60] sm:$0xff] %v816
      %849 = vst [vmem:[#allocation11 + $0x68] sm:$0xff] %v817
      %850 = vst [vmem:[#allocation11 + $0x70] sm:$0xff] %v818
      %851 = vst [vmem:[#allocation11 + $0x78] sm:$0xff] %v819
      %852 = vst [vmem:[#allocation11 + $0x80] sm:$0xff] %v820
      %853 = vst [vmem:[#allocation11 + $0x88] sm:$0xff] %v821
      %854 = vst [vmem:[#allocation11 + $0x90] sm:$0xff] %v822
      %855 = vst [vmem:[#allocation11 + $0x98] sm:$0xff] %v823
      %856 = vst [vmem:[#allocation11 + $0xa0] sm:$0xff] %v824
      %857 = vst [vmem:[#allocation11 + $0xa8] sm:$0xff] %v825
      %858 = vst [vmem:[#allocation11 + $0xb0] sm:$0xff] %v826
      %859 = vst [vmem:[#allocation11 + $0xb8] sm:$0xff] %v827
      %860 = vst [vmem:[#allocation11 + $0xc0] sm:$0xff] %v828
      %861 = vst [vmem:[#allocation11 + $0xc8] sm:$0xff] %v829
      %862 = vst [vmem:[#allocation11 + $0xd0] sm:$0xff] %v830
      %863 = vst [vmem:[#allocation11 + $0xd8] sm:$0xff] %v831
      %864 = vst [vmem:[#allocation11 + $0xe0] sm:$0xff] %v832
      %865 = vst [vmem:[#allocation11 + $0xe8] sm:$0xff] %v833
      %866 = vst [vmem:[#allocation11 + $0xf0] sm:$0xff] %v834
      %867 = vst [vmem:[#allocation11 + $0xf8] sm:$0xff] %v835
    $region49: #{tpu_custom_call.1} parent=1 // pred_fallthru
      _
    // Predicated region
    $region50: #{tpu_custom_call.1} parent=1 // pred_check
      _
    $region51: #{tpu_custom_call.1} parent=1 // pred_check_branch
      %869 = sbr.rel (0) target = $region53
    $region52: #{tpu_custom_call.1} parent=1 // pred_region
      %871 = vsyncadd [#allocation4], 0
      %s872 = sshll.u32 [#allocation11], 4
      %s873 = int_to_ptr.vmem [resolvable:$true] %s872
      %s874 = sshll.u32 %s5, 4
      %s875 = int_to_ptr.hbm [resolvable:$true] %s874
      %880 = dma.vmem_to_hbm [thread:$0]  %s873, 4096, %s875, [#allocation4], 256, 256, 16
    $region53: #{tpu_custom_call.1} parent=1 // pred_fallthru
      _
    // Predicated region
    $region54: #{tpu_custom_call.1} parent=1 // pred_check
      _
    $region55: #{tpu_custom_call.1} parent=1 // pred_check_branch
      %882 = sbr.rel (0) target = $region57
    $region56: #{tpu_custom_call.1} parent=1 // pred_region
      %884 = dma.done [#allocation4], 4096
    $region57: #{tpu_custom_call.1} parent=1 // pred_fallthru
      _
    %885 = vsyncpa [#allocation3], 1
    %886 = vsyncpa [#allocation6], 1
    %887 = vsyncpa [#allocation9], 1
    %888 = vsyncpa [#allocation4], 1

</llo_original>
